<compile_context>
chip_gen: v7x
topology: tpu7x:2x2x1
jax: 0.10.0
libtpu: 0.0.40
codegen_flags: <defaults>
</compile_context>

<pallas_src>
import jax
import jax.numpy as jnp
from jax.experimental import pallas as pl
from jax.experimental.pallas import tpu as pltpu


# ----------------------------------------------------------------------------
# Replicate the (quirky) layer-dimension logic of Network.__init__:
# for each i, if net_dims[i+1] is a string the Linear goes net_dims[i] ->
# net_dims[i+2]; otherwise net_dims[i] -> net_dims[i+1].  ReLU after every
# layer except the last.
# ----------------------------------------------------------------------------
def build_layer_dims(net_dims):
    dims = []
    for i in range(len(net_dims) - 1):
        if isinstance(net_dims[i + 1], str):
            dims.append((net_dims[i], net_dims[i + 2]))
        else:
            dims.append((net_dims[i], net_dims[i + 1]))
    return dims  # ReLU applied after all but the last entry


# ----------------------------------------------------------------------------
# Fused MLP kernel (transposed layout).
# refs = (x_t, w1, b1, w2, b2, ..., wL, bL, out_t)
#   x_t : [d_in, tile_b]                 (batch on lanes)
#   w_k : [out_k, in_k]  bf16 (MXU path)   or  [in_L, 1] f32 (VPU last layer)
#   b_k : [out_k, 1]     f32               or  [1, 1]    f32
#   out : [d_out, tile_b]
# ----------------------------------------------------------------------------
def make_mlp_kernel(num_layers, vpu_last):
    def kernel(*refs):
        x_ref = refs[0]
        param_refs = refs[1:1 + 2 * num_layers]
        o_ref = refs[1 + 2 * num_layers]

        h = x_ref[...]  # [d_in, tile_b] f32
        for li in range(num_layers):
            w_ref = param_refs[2 * li]
            b_ref = param_refs[2 * li + 1]
            is_last = li == num_layers - 1

            if is_last and vpu_last:
                # Final Linear with out_dim == 1 on the VPU/XLU:
                # w_ref is the weight column [d, 1]; broadcast-mul over lanes,
                # then reduce over the sublane (feature) axis.
                prod = h * w_ref[...]                               # [d, tile_b]
                h = jnp.sum(prod, axis=0, keepdims=True) + b_ref[...]  # [1, tile_b]
            else:
                # MXU matmul: bf16 operands, f32 accumulation.
                h = jnp.dot(
                    w_ref[...],                       # bf16 [out, in]
                    h.astype(jnp.bfloat16),           # bf16 [in, tile_b]
                    preferred_element_type=jnp.float32,
                ) + b_ref[...]                        # f32 [out, 1] broadcast
                if not is_last:                       # ReLU on all but the last
                    h = jnp.maximum(h, 0.0)

        o_ref[...] = h.astype(o_ref.dtype)

    return kernel


def mlp_forward(x, weights, biases, *, tile_b=256):
    """Fused MLP forward.

    x:          [B, d_in] float32
    weights[k]: torch-layout [out_k, in_k]
    biases[k]:  [out_k]
    Returns the squeezed network output (matches torch.squeeze semantics).
    """
    B, d_in = x.shape
    num_layers = len(weights)
    d_out = weights[-1].shape[0]

    tile_b = min(tile_b, B)
    assert B % tile_b == 0, "batch must be a multiple of the batch tile"
    num_tiles = B // tile_b

    # Final layer on VPU only when it maps 64-ish features -> 1 output.
    vpu_last = d_out == 1

    # --- prepare parameters in kernel layout (done once, host/XLA side) -----
    k_weights, k_biases = [], []
    for li, (w, b) in enumerate(zip(weights, biases)):
        if li == num_layers - 1 and vpu_last:
            k_weights.append(w.astype(jnp.float32).T)          # [in, 1] f32 column
            k_biases.append(b.astype(jnp.float32).reshape(1, 1))
        else:
            k_weights.append(w.astype(jnp.bfloat16))            # [out, in] bf16
            k_biases.append(b.astype(jnp.float32).reshape(-1, 1))  # [out, 1]

    # Transposed input: batch on the lane axis.
    x_t = x.T  # [d_in, B]

    in_specs = [pl.BlockSpec((d_in, tile_b), lambda i: (0, i))]
    for w, b in zip(k_weights, k_biases):
        in_specs.append(pl.BlockSpec(w.shape, lambda i: (0, 0)))  # whole weight
        in_specs.append(pl.BlockSpec(b.shape, lambda i: (0, 0)))  # whole bias
    out_spec = pl.BlockSpec((d_out, tile_b), lambda i: (0, i))

    args = [x_t]
    for w, b in zip(k_weights, k_biases):
        args.extend([w, b])

    out_t = pl.pallas_call(
        make_mlp_kernel(num_layers, vpu_last),
        out_shape=jax.ShapeDtypeStruct((d_out, B), x.dtype),
        grid_spec=pltpu.PrefetchScalarGridSpec(
            num_scalar_prefetch=0,
            grid=(num_tiles,),
            in_specs=in_specs,
            out_specs=out_spec,
        ),
        compiler_params=pltpu.CompilerParams(
            dimension_semantics=("parallel",)
        ),
    )(*args)

    # Back to [B, d_out]; torch.squeeze removes all size-1 dims.
    return jnp.squeeze(out_t.T)


# ----------------------------------------------------------------------------
# Pure-JAX f32 reference (matches torch semantics) for the correctness check.
# ----------------------------------------------------------------------------
def mlp_reference(x, weights, biases):
    h = x
    for li, (w, b) in enumerate(zip(weights, biases)):
        h = h @ w.T + b
        if li != len(weights) - 1:
            h = jnp.maximum(h, 0.0)
    return jnp.squeeze(h)


if __name__ == "__main__":
    # Network(net_dims=[32, 64, 64, 1]) -> Linear(32,64) ReLU Linear(64,64)
    # ReLU Linear(64,1), then squeeze -> output shape [batch].
    net_dims = [32, 64, 64, 1]
    layer_dims = build_layer_dims(net_dims)

    key = jax.random.PRNGKey(0)
    B = 512           # 2 grid steps of tile_b=256 -> both TCs used on v7x
    TILE_B = 256

    key, xk = jax.random.split(key)
    x = jax.random.normal(xk, (B, net_dims[0]), dtype=jnp.float32)

    # Deterministic PyTorch-style init: uniform(-1/sqrt(in), +1/sqrt(in)),
    # weights in torch layout [out, in], biases [out].
    weights, biases = [], []
    for (d_in, d_o) in layer_dims:
        key, wk, bk = jax.random.split(key, 3)
        bound = 1.0 / (d_in ** 0.5)
        weights.append(jax.random.uniform(wk, (d_o, d_in), jnp.float32,
                                          minval=-bound, maxval=bound))
        biases.append(jax.random.uniform(bk, (d_o,), jnp.float32,
                                         minval=-bound, maxval=bound))

    out = mlp_forward(x, weights, biases, tile_b=TILE_B)
    out = jax.block_until_ready(out)

    ref = mlp_reference(x, weights, biases)
    assert out.shape == ref.shape == (B,), (out.shape, ref.shape)
    # bf16 MXU operands (f32 accumulation) -> loosened tolerance vs f32 ref.
    assert jnp.allclose(out, ref, atol=2e-2, rtol=2e-2), "mismatch vs reference"

    print("KERNEL_OK")
</pallas_src>

<mosaic_0001>
module attributes {stable_mosaic.version = 11 : i64} {
  func.func @kernel(%arg0: i32, %arg1: memref<32x256xf32, #tpu.memory_space<vmem>>, %arg2: memref<64x32xbf16, #tpu.memory_space<vmem>>, %arg3: memref<64x1xf32, #tpu.memory_space<vmem>>, %arg4: memref<64x64xbf16, #tpu.memory_space<vmem>>, %arg5: memref<64x1xf32, #tpu.memory_space<vmem>>, %arg6: memref<64x1xf32, #tpu.memory_space<vmem>>, %arg7: memref<1x1xf32, #tpu.memory_space<vmem>>, %arg8: memref<1x256xf32, #tpu.memory_space<vmem>>) attributes {dimension_semantics = [#tpu.dimension_semantics<parallel>], iteration_bounds = array<i64: 2>, scalar_prefetch = 0 : i64, scratch_operands = 0 : i64, tpu.core_type = #tpu.core_type<tc>, window_params = [{transform_indices = @transform_0, window_bounds = array<i64: 32, 256>}, {pipeline_mode = #tpu.pipeline_mode<synchronous>, transform_indices = @transform_1, window_bounds = array<i64: 64, 32>}, {pipeline_mode = #tpu.pipeline_mode<synchronous>, transform_indices = @transform_2, window_bounds = array<i64: 64, 1>}, {pipeline_mode = #tpu.pipeline_mode<synchronous>, transform_indices = @transform_3, window_bounds = array<i64: 64, 64>}, {pipeline_mode = #tpu.pipeline_mode<synchronous>, transform_indices = @transform_4, window_bounds = array<i64: 64, 1>}, {pipeline_mode = #tpu.pipeline_mode<synchronous>, transform_indices = @transform_5, window_bounds = array<i64: 64, 1>}, {pipeline_mode = #tpu.pipeline_mode<synchronous>, transform_indices = @transform_6, window_bounds = array<i64: 1, 1>}, {transform_indices = @transform_7, window_bounds = array<i64: 1, 256>}]} {
    %c0 = arith.constant 0 : index
    %c0_0 = arith.constant 0 : index
    %0 = vector.load %arg1[%c0, %c0_0] : memref<32x256xf32, #tpu.memory_space<vmem>>, vector<32x256xf32>
    %c0_1 = arith.constant 0 : index
    %c0_2 = arith.constant 0 : index
    %1 = vector.load %arg2[%c0_1, %c0_2] : memref<64x32xbf16, #tpu.memory_space<vmem>>, vector<64x32xbf16>
    %2 = arith.truncf %0 : vector<32x256xf32> to vector<32x256xbf16>
    %cst = arith.constant dense<0.000000e+00> : vector<64x256xf32>
    %3 = tpu.matmul %1, %2, %cst {dimension_numbers = #tpu.dot_dimension_numbers<[1], [0], [0], [1], [0, 0, 1, 1], [], []>} : vector<64x32xbf16>, vector<32x256xbf16>, vector<64x256xf32> -> vector<64x256xf32>
    %c0_3 = arith.constant 0 : index
    %c0_4 = arith.constant 0 : index
    %4 = vector.load %arg3[%c0_3, %c0_4] : memref<64x1xf32, #tpu.memory_space<vmem>>, vector<64x1xf32>
    %5 = vector.broadcast %4 : vector<64x1xf32> to vector<64x256xf32>
    %6 = arith.addf %3, %5 : vector<64x256xf32>
    %cst_5 = arith.constant 0.000000e+00 : f32
    %7 = vector.broadcast %cst_5 : f32 to vector<64x256xf32>
    %8 = arith.maximumf %6, %7 : vector<64x256xf32>
    %c0_6 = arith.constant 0 : index
    %c0_7 = arith.constant 0 : index
    %9 = vector.load %arg4[%c0_6, %c0_7] : memref<64x64xbf16, #tpu.memory_space<vmem>>, vector<64x64xbf16>
    %10 = arith.truncf %8 : vector<64x256xf32> to vector<64x256xbf16>
    %cst_8 = arith.constant dense<0.000000e+00> : vector<64x256xf32>
    %11 = tpu.matmul %9, %10, %cst_8 {dimension_numbers = #tpu.dot_dimension_numbers<[1], [0], [0], [1], [0, 0, 1, 1], [], []>} : vector<64x64xbf16>, vector<64x256xbf16>, vector<64x256xf32> -> vector<64x256xf32>
    %c0_9 = arith.constant 0 : index
    %c0_10 = arith.constant 0 : index
    %12 = vector.load %arg5[%c0_9, %c0_10] : memref<64x1xf32, #tpu.memory_space<vmem>>, vector<64x1xf32>
    %13 = vector.broadcast %12 : vector<64x1xf32> to vector<64x256xf32>
    %14 = arith.addf %11, %13 : vector<64x256xf32>
    %cst_11 = arith.constant 0.000000e+00 : f32
    %15 = vector.broadcast %cst_11 : f32 to vector<64x256xf32>
    %16 = arith.maximumf %14, %15 : vector<64x256xf32>
    %c0_12 = arith.constant 0 : index
    %c0_13 = arith.constant 0 : index
    %17 = vector.load %arg6[%c0_12, %c0_13] : memref<64x1xf32, #tpu.memory_space<vmem>>, vector<64x1xf32>
    %18 = vector.broadcast %17 : vector<64x1xf32> to vector<64x256xf32>
    %19 = arith.mulf %16, %18 : vector<64x256xf32>
    %cst_14 = arith.constant dense<0.000000e+00> : vector<256xf32>
    %20 = vector.multi_reduction <add>, %19, %cst_14 [0] : vector<64x256xf32> to vector<256xf32>
    %21 = vector.shape_cast %20 : vector<256xf32> to vector<1x256xf32>
    %c0_15 = arith.constant 0 : index
    %c0_16 = arith.constant 0 : index
    %22 = vector.load %arg7[%c0_15, %c0_16] : memref<1x1xf32, #tpu.memory_space<vmem>>, vector<1x1xf32>
    %23 = vector.broadcast %22 : vector<1x1xf32> to vector<1x256xf32>
    %24 = arith.addf %21, %23 : vector<1x256xf32>
    %c0_17 = arith.constant 0 : index
    %c0_18 = arith.constant 0 : index
    %25 = vector.load %arg8[%c0_17, %c0_18] : memref<1x256xf32, #tpu.memory_space<vmem>>, vector<1x256xf32>
    tpu.vector_store %arg8[%c0_17, %c0_18], %24 {strides = array<i32>} : memref<1x256xf32, #tpu.memory_space<vmem>>, vector<1x256xf32>,
    return
  }
  func.func @transform_0(%arg0: i32) -> (i32, i32) {
    %c0_i32 = arith.constant 0 : i32
    %c0_i32_0 = arith.constant 0 : i32
    return %c0_i32, %arg0 : i32, i32
  }
  func.func @transform_1(%arg0: i32) -> (i32, i32) {
    %c0_i32 = arith.constant 0 : i32
    %c0_i32_0 = arith.constant 0 : i32
    %c0_i32_1 = arith.constant 0 : i32
    return %c0_i32, %c0_i32_0 : i32, i32
  }
  func.func @transform_2(%arg0: i32) -> (i32, i32) {
    %c0_i32 = arith.constant 0 : i32
    %c0_i32_0 = arith.constant 0 : i32
    %c0_i32_1 = arith.constant 0 : i32
    return %c0_i32, %c0_i32_0 : i32, i32
  }
  func.func @transform_3(%arg0: i32) -> (i32, i32) {
    %c0_i32 = arith.constant 0 : i32
    %c0_i32_0 = arith.constant 0 : i32
    %c0_i32_1 = arith.constant 0 : i32
    return %c0_i32, %c0_i32_0 : i32, i32
  }
  func.func @transform_4(%arg0: i32) -> (i32, i32) {
    %c0_i32 = arith.constant 0 : i32
    %c0_i32_0 = arith.constant 0 : i32
    %c0_i32_1 = arith.constant 0 : i32
    return %c0_i32, %c0_i32_0 : i32, i32
  }
  func.func @transform_5(%arg0: i32) -> (i32, i32) {
    %c0_i32 = arith.constant 0 : i32
    %c0_i32_0 = arith.constant 0 : i32
    %c0_i32_1 = arith.constant 0 : i32
    return %c0_i32, %c0_i32_0 : i32, i32
  }
  func.func @transform_6(%arg0: i32) -> (i32, i32) {
    %c0_i32 = arith.constant 0 : i32
    %c0_i32_0 = arith.constant 0 : i32
    %c0_i32_1 = arith.constant 0 : i32
    return %c0_i32, %c0_i32_0 : i32, i32
  }
  func.func @transform_7(%arg0: i32) -> (i32, i32) {
    %c0_i32 = arith.constant 0 : i32
    %c0_i32_0 = arith.constant 0 : i32
    return %c0_i32, %arg0 : i32, i32
  }
}

</mosaic_0001>

<llo_original>
// kernel: tpu_custom_call.1
$region0: #{tpu_custom_call.1}
  #allocation0 [shape = 'u32[]', space=smem, size = 0x4, offset = 0x4, fixed_abs, tag = 'smem constant byte address 0x4 - core index']
  #allocation1 [shape = 'u32[144,128]{1,0:T(1,128)}', space=vmem, size = 0x12000, scoped, tag = 'internal scratch']
  #allocation2 [shape = 'f32[1,1]{1,0:T(1,128)S(1)}', space=vmem, size = 0x200, scoped, tag = 'scoped memory for tpu_custom_call.1']
  %s0 = inlined_call_operand.vmem [shape: f32[32,512], index: 0, kind: input, shape index: {}]
  %s1 = inlined_call_operand.vmem [shape: bf16[64,32], index: 1, kind: input, shape index: {}]
  %s2 = inlined_call_operand.vmem [shape: f32[64,1], index: 2, kind: input, shape index: {}]
  %s3 = inlined_call_operand.vmem [shape: bf16[64,64], index: 3, kind: input, shape index: {}]
  %s4 = inlined_call_operand.vmem [shape: f32[64,1], index: 4, kind: input, shape index: {}]
  %s5 = inlined_call_operand.vmem [shape: f32[64,1], index: 5, kind: input, shape index: {}]
  %s6 = inlined_call_operand.<no memory space> [shape: f32[1,1], index: 6, kind: input, shape index: {}]
  %s7 = inlined_call_operand.hbm [shape: f32[1,512], index: 7, kind: output, shape index: {}]
  %s8 = sld [smem:[#allocation0]]
  $region84: #{tpu_custom_call.1} parent=0
    _
  %s10 = ssub.s32 1, %s8
  %s11 = scalar_select 0, %s10, %s8
  %v12 = vstv %s6
  %13 = vst [vmem:[#allocation2] sm:$0x1] %v12
  $region1: #{tpu_custom_call.1} parent=0
    #allocation3 [shape = 'u8[65536]{0}', space=vmem, size = 0x10000, scoped, tag = 'input window, operand 0']
    #allocation4 [shape = 'u8[2048]{0}', space=vmem, size = 0x800, scoped, tag = 'output window, operand 0']
    #allocation5 [shape = 's32[2]{0}', space=sflag, size = 0x8, scoped, tag = 'scoped memory for tpu_custom_call.1']
    %14 = vsyncpa [#allocation5], 0
    %s15 = scalar_lea.sflag [#allocation5], 1
    %16 = vsyncpa %s15, 0
    loop: start=0, step=1, limit=4
    $region2: #{tpu_custom_call.1} parent=1 // loop_pre_header
      _
    $region3: #{tpu_custom_call.1} parent=1 // loop_header
      %s18 = sphi 0, %s22
      %p19 = scmp.ge.s32.totalorder %s18, 4
      %s28 = sphi 0, %s30
      %s31 = sphi 0, %s28
      %s32 = sphi 0, %s31
      %s48 = sphi 0, %s32
      %s52 = sphi 0, %s52
      %s54 = sphi 0, %s52
      %s55 = sphi 0, %s54
      %s69 = sphi 0, %s55
      %s73 = sphi 0, %s73
      %s75 = sphi 0, %s73
      %s76 = sphi 0, %s75
      %s90 = sphi 0, %s76
      %s94 = sphi 0, %s94
      %s96 = sphi 0, %s94
      %s97 = sphi 0, %s96
      %s111 = sphi 0, %s97
      %s115 = sphi 0, %s115
      %s117 = sphi 0, %s115
      %s118 = sphi 0, %s117
      %s132 = sphi 0, %s118
      %s136 = sphi 0, %s136
      %s138 = sphi 0, %s136
      %s139 = sphi 0, %s138
      %s153 = sphi 0, %s139
      %s157 = sphi 0, %s157
      %s159 = sphi 0, %s157
      %s160 = sphi 0, %s159
      %s174 = sphi 0, %s160
      %s180 = sphi 0, %s182
      %s183 = sphi 0, %s180
      %s184 = sphi 0, %s183
      %s200 = sphi 0, %s184
    $region4: #{tpu_custom_call.1} parent=1 // loop_header_branch
      %21 = sbr.rel (%p19) target = $region8
    $region5: #{tpu_custom_call.1} parent=1 // loop_body
      %s23 = ssub.s32 %s18, 1
      %s24 = ssub.s32 %s18, 2
      %s25 = sadd.s32 %s18, 1
      %s26 = ssub.s32 %s18, %s25
      %p27 = scmp.eq.s32.totalorder %s26, 0
      %s29 = sadd.s32 %s28, 1
      %s30 = scalar_select %p27, %s28, %s29
      %p33 = pneg %p27
      %p34 = scmp.eq.s32.totalorder %s18, 1
      %p35 = por %p33, %p34
      %p36 = scmp.ne.s32.totalorder %s28, %s31
      %p37 = scmp.eq.s32.totalorder %s18, 0
      %p38 = por %p36, %p37
      %p39 = scmp.ne.s32.totalorder %s28, %s31
      %p40 = scmp.eq.s32.totalorder %s23, 1
      %p41 = por %p39, %p40
      %p42 = scmp.ne.s32.totalorder %s31, %s32
      %p43 = scmp.eq.s32.totalorder %s23, 0
      %p44 = por %p42, %p43
      %p45 = scmp.ne.s32.totalorder %s31, %s32
      %p46 = scmp.eq.s32.totalorder %s24, 1
      %p47 = por %p45, %p46
      %p49 = scmp.ne.s32.totalorder %s32, %s48
      %p50 = scmp.eq.s32.totalorder %s24, 0
      %p51 = por %p49, %p50
      %s53 = sadd.s32 %s52, 1
      %p56 = scmp.eq.s32.totalorder %s18, 1
      %p57 = scmp.ne.s32.totalorder %s52, %s54
      %p58 = scmp.eq.s32.totalorder %s18, 0
      %p59 = por %p57, %p58
      %p60 = scmp.ne.s32.totalorder %s52, %s54
      %p61 = scmp.eq.s32.totalorder %s23, 1
      %p62 = por %p60, %p61
      %p63 = scmp.ne.s32.totalorder %s54, %s55
      %p64 = scmp.eq.s32.totalorder %s23, 0
      %p65 = por %p63, %p64
      %p66 = scmp.ne.s32.totalorder %s54, %s55
      %p67 = scmp.eq.s32.totalorder %s24, 1
      %p68 = por %p66, %p67
      %p70 = scmp.ne.s32.totalorder %s55, %s69
      %p71 = scmp.eq.s32.totalorder %s24, 0
      %p72 = por %p70, %p71
      %s74 = sadd.s32 %s73, 1
      %p77 = scmp.eq.s32.totalorder %s18, 1
      %p78 = scmp.ne.s32.totalorder %s73, %s75
      %p79 = scmp.eq.s32.totalorder %s18, 0
      %p80 = por %p78, %p79
      %p81 = scmp.ne.s32.totalorder %s73, %s75
      %p82 = scmp.eq.s32.totalorder %s23, 1
      %p83 = por %p81, %p82
      %p84 = scmp.ne.s32.totalorder %s75, %s76
      %p85 = scmp.eq.s32.totalorder %s23, 0
      %p86 = por %p84, %p85
      %p87 = scmp.ne.s32.totalorder %s75, %s76
      %p88 = scmp.eq.s32.totalorder %s24, 1
      %p89 = por %p87, %p88
      %p91 = scmp.ne.s32.totalorder %s76, %s90
      %p92 = scmp.eq.s32.totalorder %s24, 0
      %p93 = por %p91, %p92
      %s95 = sadd.s32 %s94, 1
      %p98 = scmp.eq.s32.totalorder %s18, 1
      %p99 = scmp.ne.s32.totalorder %s94, %s96
      %p100 = scmp.eq.s32.totalorder %s18, 0
      %p101 = por %p99, %p100
      %p102 = scmp.ne.s32.totalorder %s94, %s96
      %p103 = scmp.eq.s32.totalorder %s23, 1
      %p104 = por %p102, %p103
      %p105 = scmp.ne.s32.totalorder %s96, %s97
      %p106 = scmp.eq.s32.totalorder %s23, 0
      %p107 = por %p105, %p106
      %p108 = scmp.ne.s32.totalorder %s96, %s97
      %p109 = scmp.eq.s32.totalorder %s24, 1
      %p110 = por %p108, %p109
      %p112 = scmp.ne.s32.totalorder %s97, %s111
      %p113 = scmp.eq.s32.totalorder %s24, 0
      %p114 = por %p112, %p113
      %s116 = sadd.s32 %s115, 1
      %p119 = scmp.eq.s32.totalorder %s18, 1
      %p120 = scmp.ne.s32.totalorder %s115, %s117
      %p121 = scmp.eq.s32.totalorder %s18, 0
      %p122 = por %p120, %p121
      %p123 = scmp.ne.s32.totalorder %s115, %s117
      %p124 = scmp.eq.s32.totalorder %s23, 1
      %p125 = por %p123, %p124
      %p126 = scmp.ne.s32.totalorder %s117, %s118
      %p127 = scmp.eq.s32.totalorder %s23, 0
      %p128 = por %p126, %p127
      %p129 = scmp.ne.s32.totalorder %s117, %s118
      %p130 = scmp.eq.s32.totalorder %s24, 1
      %p131 = por %p129, %p130
      %p133 = scmp.ne.s32.totalorder %s118, %s132
      %p134 = scmp.eq.s32.totalorder %s24, 0
      %p135 = por %p133, %p134
      %s137 = sadd.s32 %s136, 1
      %p140 = scmp.eq.s32.totalorder %s18, 1
      %p141 = scmp.ne.s32.totalorder %s136, %s138
      %p142 = scmp.eq.s32.totalorder %s18, 0
      %p143 = por %p141, %p142
      %p144 = scmp.ne.s32.totalorder %s136, %s138
      %p145 = scmp.eq.s32.totalorder %s23, 1
      %p146 = por %p144, %p145
      %p147 = scmp.ne.s32.totalorder %s138, %s139
      %p148 = scmp.eq.s32.totalorder %s23, 0
      %p149 = por %p147, %p148
      %p150 = scmp.ne.s32.totalorder %s138, %s139
      %p151 = scmp.eq.s32.totalorder %s24, 1
      %p152 = por %p150, %p151
      %p154 = scmp.ne.s32.totalorder %s139, %s153
      %p155 = scmp.eq.s32.totalorder %s24, 0
      %p156 = por %p154, %p155
      %s158 = sadd.s32 %s157, 1
      %p161 = scmp.eq.s32.totalorder %s18, 1
      %p162 = scmp.ne.s32.totalorder %s157, %s159
      %p163 = scmp.eq.s32.totalorder %s18, 0
      %p164 = por %p162, %p163
      %p165 = scmp.ne.s32.totalorder %s157, %s159
      %p166 = scmp.eq.s32.totalorder %s23, 1
      %p167 = por %p165, %p166
      %p168 = scmp.ne.s32.totalorder %s159, %s160
      %p169 = scmp.eq.s32.totalorder %s23, 0
      %p170 = por %p168, %p169
      %p171 = scmp.ne.s32.totalorder %s159, %s160
      %p172 = scmp.eq.s32.totalorder %s24, 1
      %p173 = por %p171, %p172
      %p175 = scmp.ne.s32.totalorder %s160, %s174
      %p176 = scmp.eq.s32.totalorder %s24, 0
      %p177 = por %p175, %p176
      %s178 = ssub.s32 %s18, %s25
      %p179 = scmp.eq.s32.totalorder %s178, 0
      %s181 = sadd.s32 %s180, 1
      %s182 = scalar_select %p179, %s180, %s181
      %p185 = pneg %p179
      %p186 = scmp.eq.s32.totalorder %s18, 1
      %p187 = por %p185, %p186
      %p188 = scmp.ne.s32.totalorder %s180, %s183
      %p189 = scmp.eq.s32.totalorder %s18, 0
      %p190 = por %p188, %p189
      %p191 = scmp.ne.s32.totalorder %s180, %s183
      %p192 = scmp.eq.s32.totalorder %s23, 1
      %p193 = por %p191, %p192
      %p194 = scmp.ne.s32.totalorder %s183, %s184
      %p195 = scmp.eq.s32.totalorder %s23, 0
      %p196 = por %p194, %p195
      %p197 = scmp.ne.s32.totalorder %s183, %s184
      %p198 = scmp.eq.s32.totalorder %s24, 1
      %p199 = por %p197, %p198
      %p201 = scmp.ne.s32.totalorder %s184, %s200
      %p202 = scmp.eq.s32.totalorder %s24, 0
      %p203 = por %p201, %p202
      %p204 = scmp.le.s32.totalorder 1, %s18
      %p205 = scmp.lt.s32.totalorder %s18, 3
      %p206 = pnand %p204, %p205
      %p207 = pneg %p206
      // Predicated region
      $region9: #{tpu_custom_call.1} parent=5 // pred_check
        _
      $region10: #{tpu_custom_call.1} parent=5 // pred_check_branch
        %209 = sbr.rel (%p206) target = $region12
      $region11: #{tpu_custom_call.1} parent=5 // pred_region
        %s210 = ssub.s32 %s18, 1
        // Predicated region
        $region13: #{tpu_custom_call.1} parent=11 // pred_check
          %p211 = pneg %p65
        $region14: #{tpu_custom_call.1} parent=11 // pred_check_branch
          %213 = sbr.rel (%p211) target = $region16
        $region15: #{tpu_custom_call.1} parent=11 // pred_region
          _
        $region16: #{tpu_custom_call.1} parent=11 // pred_fallthru
          _
        // Predicated region
        $region17: #{tpu_custom_call.1} parent=11 // pred_check
          %p214 = pneg %p86
        $region18: #{tpu_custom_call.1} parent=11 // pred_check_branch
          %216 = sbr.rel (%p214) target = $region20
        $region19: #{tpu_custom_call.1} parent=11 // pred_region
          _
        $region20: #{tpu_custom_call.1} parent=11 // pred_fallthru
          _
        // Predicated region
        $region21: #{tpu_custom_call.1} parent=11 // pred_check
          %p217 = pneg %p107
        $region22: #{tpu_custom_call.1} parent=11 // pred_check_branch
          %219 = sbr.rel (%p217) target = $region24
        $region23: #{tpu_custom_call.1} parent=11 // pred_region
          _
        $region24: #{tpu_custom_call.1} parent=11 // pred_fallthru
          _
        // Predicated region
        $region25: #{tpu_custom_call.1} parent=11 // pred_check
          %p220 = pneg %p128
        $region26: #{tpu_custom_call.1} parent=11 // pred_check_branch
          %222 = sbr.rel (%p220) target = $region28
        $region27: #{tpu_custom_call.1} parent=11 // pred_region
          _
        $region28: #{tpu_custom_call.1} parent=11 // pred_fallthru
          _
        // Predicated region
        $region29: #{tpu_custom_call.1} parent=11 // pred_check
          %p223 = pneg %p149
        $region30: #{tpu_custom_call.1} parent=11 // pred_check_branch
          %225 = sbr.rel (%p223) target = $region32
        $region31: #{tpu_custom_call.1} parent=11 // pred_region
          _
        $region32: #{tpu_custom_call.1} parent=11 // pred_fallthru
          _
        // Predicated region
        $region33: #{tpu_custom_call.1} parent=11 // pred_check
          %p226 = pneg %p170
        $region34: #{tpu_custom_call.1} parent=11 // pred_check_branch
          %228 = sbr.rel (%p226) target = $region36
        $region35: #{tpu_custom_call.1} parent=11 // pred_region
          _
        $region36: #{tpu_custom_call.1} parent=11 // pred_fallthru
          _
      $region12: #{tpu_custom_call.1} parent=5 // pred_fallthru
        _
      %p229 = scmp.lt.s32.totalorder %s18, 2
      // Predicated region
      $region37: #{tpu_custom_call.1} parent=5 // pred_check
        %p230 = pneg %p229
      $region38: #{tpu_custom_call.1} parent=5 // pred_check_branch
        %232 = sbr.rel (%p230) target = $region40
      $region39: #{tpu_custom_call.1} parent=5 // pred_region
        // Predicated region
        $region41: #{tpu_custom_call.1} parent=39 // pred_check
          %p233 = pneg %p38
        $region42: #{tpu_custom_call.1} parent=39 // pred_check_branch
          %235 = sbr.rel (%p233) target = $region44
        $region43: #{tpu_custom_call.1} parent=39 // pred_region
          %s236 = sand.u32 %s28, 1
          %s237 = sand.u32 %s28, 1
          %s238 = smul.addr %s237, 64
          %s239 = scalar_lea.vmem [#allocation3], %s238
          %s240 = smul.u32 2, %s18
          %s241 = smul.addr %s240, 8
          %s242 = scalar_lea.vmem %s0, %s241
          // Predicated region
          $region45: #{tpu_custom_call.1} parent=43 // pred_check
            _
          $region46: #{tpu_custom_call.1} parent=43 // pred_check_branch
            %244 = sbr.rel (0) target = $region48
          $region47: #{tpu_custom_call.1} parent=43 // pred_region
            // Predicated region
            $region49: #{tpu_custom_call.1} parent=47 // pred_check
              _
            $region50: #{tpu_custom_call.1} parent=47 // pred_check_branch
              %246 = sbr.rel (0) target = $region52
            $region51: #{tpu_custom_call.1} parent=47 // pred_region
              loop: start=0, step=1, limit=1
              $region53: #{tpu_custom_call.1} parent=51 // loop_pre_header
                _
              $region54: #{tpu_custom_call.1} parent=51 // loop_header
                %s248 = sphi 0, %s252
                %p249 = scmp.ge.s32.totalorder %s248, 1
                %s253 = sphi %s242, %s242
                %s254 = sphi %s239, %s239
              $region55: #{tpu_custom_call.1} parent=51 // loop_header_branch
                %251 = sbr.rel (%p249) target = $region59
              $region56: #{tpu_custom_call.1} parent=51 // loop_body
                %v255 = vld [vmem:[%s253] sm:$0xff]
                %256 = vst [vmem:[%s254] sm:$0xff] %v255
                %v257 = vld [vmem:[%s253 + $0x8] sm:$0xff]
                %258 = vst [vmem:[%s254 + $0x8] sm:$0xff] %v257
                %v259 = vld [vmem:[%s253 + $0x20] sm:$0xff]
                %260 = vst [vmem:[%s254 + $0x10] sm:$0xff] %v259
                %v261 = vld [vmem:[%s253 + $0x28] sm:$0xff]
                %262 = vst [vmem:[%s254 + $0x18] sm:$0xff] %v261
                %v263 = vld [vmem:[%s253 + $0x40] sm:$0xff]
                %264 = vst [vmem:[%s254 + $0x20] sm:$0xff] %v263
                %v265 = vld [vmem:[%s253 + $0x48] sm:$0xff]
                %266 = vst [vmem:[%s254 + $0x28] sm:$0xff] %v265
                %v267 = vld [vmem:[%s253 + $0x60] sm:$0xff]
                %268 = vst [vmem:[%s254 + $0x30] sm:$0xff] %v267
                %v269 = vld [vmem:[%s253 + $0x68] sm:$0xff]
                %270 = vst [vmem:[%s254 + $0x38] sm:$0xff] %v269
              $region57: #{tpu_custom_call.1} parent=51 // loop_footer
                %s252 = sadd.s32 1, %s248
              $region58: #{tpu_custom_call.1} parent=51 // loop_footer_branch
                %247 = sbr.rel target = $region54
              $region59: #{tpu_custom_call.1} parent=51 // loop_exit
                _
            $region52: #{tpu_custom_call.1} parent=47 // pred_fallthru
              _
            // Predicated region
            $region60: #{tpu_custom_call.1} parent=47 // pred_check
              _
            $region61: #{tpu_custom_call.1} parent=47 // pred_check_branch
              %272 = sbr.rel target = $region63
            $region62: #{tpu_custom_call.1} parent=47 // pred_region
              _
            $region63: #{tpu_custom_call.1} parent=47 // pred_fallthru
              _
          $region48: #{tpu_custom_call.1} parent=43 // pred_fallthru
            _
          %273 = vnop
        $region44: #{tpu_custom_call.1} parent=39 // pred_fallthru
          _
      $region40: #{tpu_custom_call.1} parent=5 // pred_fallthru
        _
      %p274 = scmp.le.s32.totalorder 1, %s18
      %p275 = scmp.lt.s32.totalorder %s18, 3
      %p276 = pnand %p274, %p275
      %p277 = pneg %p276
      // Predicated region
      $region64: #{tpu_custom_call.1} parent=5 // pred_check
        _
      $region65: #{tpu_custom_call.1} parent=5 // pred_check_branch
        %279 = sbr.rel (%p276) target = $region67
      $region66: #{tpu_custom_call.1} parent=5 // pred_region
        %s280 = ssub.s32 %s18, 1
        %s281 = sand.u32 %s31, 1
        %s282 = sand.u32 %s31, 1
        %s283 = smul.addr %s282, 64
        %s284 = scalar_lea.vmem [#allocation3], %s283
        // Predicated region
        $region68: #{tpu_custom_call.1} parent=66 // pred_check
          %p285 = pneg %p44
        $region69: #{tpu_custom_call.1} parent=66 // pred_check_branch
          %287 = sbr.rel (%p285) target = $region71
        $region70: #{tpu_custom_call.1} parent=66 // pred_region
          _
        $region71: #{tpu_custom_call.1} parent=66 // pred_fallthru
          _
        %s288 = sand.u32 %s31, 1
        %s289 = sand.u32 %s31, 1
        %s290 = smul.addr %s289, 64
        %s291 = scalar_lea.vmem [#allocation3], %s290
        %p292 = pneg %p44
        %p293 = pneg %p41
        %p294 = pneg %p65
        %p295 = pneg %p62
        %p296 = pneg %p86
        %p297 = pneg %p83
        %p298 = pneg %p107
        %p299 = pneg %p104
        %p300 = pneg %p128
        %p301 = pneg %p125
        %p302 = pneg %p149
        %p303 = pneg %p146
        %p304 = pneg %p170
        %p305 = pneg %p167
        %p306 = pneg %p196
        %p307 = pneg %p193
        %s308 = sand.u32 %s183, 1
        %s309 = scalar_lea.sflag [#allocation5], %s308
        %s310 = sand.u32 %s183, 1
        %s311 = smul.addr %s310, 2
        %s312 = scalar_lea.vmem [#allocation4], %s311
        %s313 = smul.u32 2, %s23
        %s314 = smul.u32 2, %s23
        %v316 = vld [vmem:[%s284] sm:$0xff]
        %v317 = vld [vmem:[%s284 + $0x8] sm:$0xff]
        %v318 = vld [vmem:[%s284 + $0x10] sm:$0xff]
        %v319 = vld [vmem:[%s284 + $0x18] sm:$0xff]
        %v320 = vld [vmem:[%s284 + $0x20] sm:$0xff]
        %v321 = vld [vmem:[%s284 + $0x28] sm:$0xff]
        %v322 = vld [vmem:[%s284 + $0x30] sm:$0xff]
        %v323 = vld [vmem:[%s284 + $0x38] sm:$0xff]
        %v324 = vld [vmem:[%s1] sm:$0xf]
        %v325 = vld [vmem:[%s1 + $0x4] sm:$0xf]
        %v326 = vld [vmem:[%s1 + $0x8] sm:$0xf]
        %v327 = vld [vmem:[%s1 + $0xc] sm:$0xf]
        %v328 = vld [vmem:[%s1 + $0x10] sm:$0xf]
        %v329 = vld [vmem:[%s1 + $0x14] sm:$0xf]
        %v330 = vld [vmem:[%s1 + $0x18] sm:$0xf]
        %v331 = vld [vmem:[%s1 + $0x1c] sm:$0xf]
        %v332 = vpack.c.bf16 %v318, %v316
        %v333 = vpack.c.bf16 %v319, %v317
        %v334 = vpack.c.bf16 %v322, %v320
        %v335 = vpack.c.bf16 %v323, %v321
        %v336 = vld [vmem:[%s2] sm:$0xff]
        %v337 = vld [vmem:[%s2 + $0x8] sm:$0xff]
        %v338 = vld [vmem:[%s2 + $0x10] sm:$0xff]
        %v339 = vld [vmem:[%s2 + $0x18] sm:$0xff]
        %v340 = vld [vmem:[%s2 + $0x20] sm:$0xff]
        %v341 = vld [vmem:[%s2 + $0x28] sm:$0xff]
        %v342 = vld [vmem:[%s2 + $0x30] sm:$0xff]
        %v343 = vld [vmem:[%s2 + $0x38] sm:$0xff]
        %345 = vset.pattern.permute.xlu0 0
        %346 = vperm.xlu0 %345, %v336
        %v347 = vpop.permute.xlu0 %346
        %350 = vset.pattern.permute.xlu0 0
        %351 = vperm.xlu0 %350, %v337
        %v352 = vpop.permute.xlu0 %351
        %355 = vset.pattern.permute.xlu0 0
        %356 = vperm.xlu0 %355, %v338
        %v357 = vpop.permute.xlu0 %356
        %360 = vset.pattern.permute.xlu0 0
        %361 = vperm.xlu0 %360, %v339
        %v362 = vpop.permute.xlu0 %361
        %365 = vset.pattern.permute.xlu0 0
        %366 = vperm.xlu0 %365, %v340
        %v367 = vpop.permute.xlu0 %366
        %370 = vset.pattern.permute.xlu0 0
        %371 = vperm.xlu0 %370, %v341
        %v372 = vpop.permute.xlu0 %371
        %375 = vset.pattern.permute.xlu0 0
        %376 = vperm.xlu0 %375, %v342
        %v377 = vpop.permute.xlu0 %376
        %380 = vset.pattern.permute.xlu0 0
        %381 = vperm.xlu0 %380, %v343
        %v382 = vpop.permute.xlu0 %381
        %v392 = vunpack.c.l.b16 %v324
        %v393 = vunpack.c.l.b16 %v325
        %v394 = vunpack.c.l.b16 %v326
        %v395 = vunpack.c.l.b16 %v327
        %v396 = vunpack.c.l.b16 %v328
        %v397 = vunpack.c.l.b16 %v329
        %v398 = vunpack.c.l.b16 %v330
        %v399 = vunpack.c.l.b16 %v331
        %v400 = vpack.c.b16 %v393, %v392
        %v401 = vpack.c.b16 %v395, %v394
        %v402 = vpack.c.b16 %v397, %v396
        %v403 = vpack.c.b16 %v399, %v398
        %vm404 = vcmask 261120
        %v406 = vsel %vm404, %v400, 0
        %v409 = vsel %vm404, %v401, 0
        %v412 = vsel %vm404, %v402, 0
        %v415 = vsel %vm404, %v403, 0
        %417 = vmatprep.subr.bf16.mxu0 %v333
        %418 = vmatpush1.bf16.msra.mxu0 %v332
        %419 = vmatprep.subr.bf16.mxu0 %v335
        %420 = vmatpush1.bf16.msra.mxu0 %v334
        %421 = vmatprep.subr.bf16.mxu0 0
        %422 = vmatpush1.bf16.msra.mxu0 0
        %423 = vmatprep.subr.bf16.mxu0 0
        %424 = vmatpush1.bf16.msra.mxu0 0
        %425 = vmatprep.subr.bf16.mxu0 0
        %426 = vmatpush1.bf16.msra.mxu0 0
        %427 = vmatprep.subr.bf16.mxu0 0
        %428 = vmatpush1.bf16.msra.mxu0 0
        %429 = vmatprep.subr.bf16.mxu0 0
        %430 = vmatpush1.bf16.msra.mxu0 0
        %431 = vmatprep.subr.bf16.mxu0 0
        %432 = vmatpush1.bf16.msra.mxu0 0
        %433 = vmatprep.subr.bf16.mxu0 0
        %434 = vmatpush1.bf16.msra.mxu0 0
        %435 = vmatprep.subr.bf16.mxu0 0
        %436 = vmatpush1.bf16.msra.mxu0 0
        %437 = vmatprep.subr.bf16.mxu0 0
        %438 = vmatpush1.bf16.msra.mxu0 0
        %439 = vmatprep.subr.bf16.mxu0 0
        %440 = vmatpush1.bf16.msra.mxu0 0
        %441 = vmatprep.subr.bf16.mxu0 0
        %442 = vmatpush1.bf16.msra.mxu0 0
        %443 = vmatprep.subr.bf16.mxu0 0
        %444 = vmatpush1.bf16.msra.mxu0 0
        %445 = vmatprep.subr.bf16.mxu0 0
        %446 = vmatpush1.bf16.msra.mxu0 0
        %447 = vmatprep.subr.bf16.mxu0 0
        %448 = vmatpush1.bf16.msra.mxu0 0
        %449 = vmatprep.mubr.bf16.mxu0 0
        %450 = vmatmul.mubr.bf16.gmra.mrb[0].mxu0 %v406
        %v451 = vpop.f32.mrb[0].mxu0
        %v452 = vadd.f32 %v347, %v451
        %v453 = vpop.f32.mrb[0].mxu0
        %v454 = vadd.f32 %v347, %v453
        %v455 = vpop.f32.mrb[0].mxu0
        %v456 = vadd.f32 %v352, %v455
        %v457 = vpop.f32.mrb[0].mxu0
        %v458 = vadd.f32 %v352, %v457
        %459 = vmatprep.mubr.bf16.mxu0 0
        %460 = vmatmul.mubr.bf16.gmra.mrb[0].mxu0 %v409
        %v461 = vpop.f32.mrb[0].mxu0
        %v462 = vadd.f32 %v357, %v461
        %v463 = vpop.f32.mrb[0].mxu0
        %v464 = vadd.f32 %v357, %v463
        %v465 = vpop.f32.mrb[0].mxu0
        %v466 = vadd.f32 %v362, %v465
        %v467 = vpop.f32.mrb[0].mxu0
        %v468 = vadd.f32 %v362, %v467
        %469 = vmatprep.mubr.bf16.mxu0 0
        %470 = vmatmul.mubr.bf16.gmra.mrb[0].mxu0 %v412
        %v471 = vpop.f32.mrb[0].mxu0
        %v472 = vadd.f32 %v367, %v471
        %v473 = vpop.f32.mrb[0].mxu0
        %v474 = vadd.f32 %v367, %v473
        %v475 = vpop.f32.mrb[0].mxu0
        %v476 = vadd.f32 %v372, %v475
        %v477 = vpop.f32.mrb[0].mxu0
        %v478 = vadd.f32 %v372, %v477
        %479 = vmatprep.mubr.bf16.mxu0 0
        %480 = vmatmul.mubr.bf16.gmra.mrb[0].mxu0 %v415
        %v481 = vpop.f32.mrb[0].mxu0
        %v482 = vadd.f32 %v377, %v481
        %v483 = vpop.f32.mrb[0].mxu0
        %v484 = vadd.f32 %v377, %v483
        %v485 = vpop.f32.mrb[0].mxu0
        %v486 = vadd.f32 %v382, %v485
        %v487 = vpop.f32.mrb[0].mxu0
        %v488 = vadd.f32 %v382, %v487
        %489 = vdwg.mxu0
        %v490 = vmax.f32 %v452, 0.0
        %v491 = vmax.f32 %v454, 0.0
        %v492 = vmax.f32 %v456, 0.0
        %v493 = vmax.f32 %v458, 0.0
        %v494 = vmax.f32 %v462, 0.0
        %v495 = vmax.f32 %v464, 0.0
        %v496 = vmax.f32 %v466, 0.0
        %v497 = vmax.f32 %v468, 0.0
        %v498 = vmax.f32 %v472, 0.0
        %v499 = vmax.f32 %v474, 0.0
        %v500 = vmax.f32 %v476, 0.0
        %v501 = vmax.f32 %v478, 0.0
        %v502 = vmax.f32 %v482, 0.0
        %v503 = vmax.f32 %v484, 0.0
        %v504 = vmax.f32 %v486, 0.0
        %v505 = vmax.f32 %v488, 0.0
        %v506 = vld [vmem:[%s3] sm:$0xf]
        %v507 = vld [vmem:[%s3 + $0x4] sm:$0xf]
        %v508 = vld [vmem:[%s3 + $0x8] sm:$0xf]
        %v509 = vld [vmem:[%s3 + $0xc] sm:$0xf]
        %v510 = vld [vmem:[%s3 + $0x10] sm:$0xf]
        %v511 = vld [vmem:[%s3 + $0x14] sm:$0xf]
        %v512 = vld [vmem:[%s3 + $0x18] sm:$0xf]
        %v513 = vld [vmem:[%s3 + $0x1c] sm:$0xf]
        %v514 = vpack.c.bf16 %v492, %v490
        %v515 = vpack.c.bf16 %v493, %v491
        %v516 = vpack.c.bf16 %v496, %v494
        %v517 = vpack.c.bf16 %v497, %v495
        %v518 = vpack.c.bf16 %v500, %v498
        %v519 = vpack.c.bf16 %v501, %v499
        %v520 = vpack.c.bf16 %v504, %v502
        %v521 = vpack.c.bf16 %v505, %v503
        %v522 = vld [vmem:[%s4] sm:$0xff]
        %v523 = vld [vmem:[%s4 + $0x8] sm:$0xff]
        %v524 = vld [vmem:[%s4 + $0x10] sm:$0xff]
        %v525 = vld [vmem:[%s4 + $0x18] sm:$0xff]
        %v526 = vld [vmem:[%s4 + $0x20] sm:$0xff]
        %v527 = vld [vmem:[%s4 + $0x28] sm:$0xff]
        %v528 = vld [vmem:[%s4 + $0x30] sm:$0xff]
        %v529 = vld [vmem:[%s4 + $0x38] sm:$0xff]
        %531 = vset.pattern.permute.xlu0 0
        %532 = vperm.xlu0 %531, %v522
        %v533 = vpop.permute.xlu0 %532
        %536 = vset.pattern.permute.xlu0 0
        %537 = vperm.xlu0 %536, %v523
        %v538 = vpop.permute.xlu0 %537
        %541 = vset.pattern.permute.xlu0 0
        %542 = vperm.xlu0 %541, %v524
        %v543 = vpop.permute.xlu0 %542
        %546 = vset.pattern.permute.xlu0 0
        %547 = vperm.xlu0 %546, %v525
        %v548 = vpop.permute.xlu0 %547
        %551 = vset.pattern.permute.xlu0 0
        %552 = vperm.xlu0 %551, %v526
        %v553 = vpop.permute.xlu0 %552
        %556 = vset.pattern.permute.xlu0 0
        %557 = vperm.xlu0 %556, %v527
        %v558 = vpop.permute.xlu0 %557
        %561 = vset.pattern.permute.xlu0 0
        %562 = vperm.xlu0 %561, %v528
        %v563 = vpop.permute.xlu0 %562
        %566 = vset.pattern.permute.xlu0 0
        %567 = vperm.xlu0 %566, %v529
        %v568 = vpop.permute.xlu0 %567
        %v578 = vunpack.c.l.b16 %v506
        %v579 = vunpack.c.l.b16 %v507
        %v580 = vunpack.c.l.b16 %v508
        %v581 = vunpack.c.l.b16 %v509
        %v582 = vunpack.c.l.b16 %v510
        %v583 = vunpack.c.l.b16 %v511
        %v584 = vunpack.c.l.b16 %v512
        %v585 = vunpack.c.l.b16 %v513
        %v586 = vpack.c.b16 %v579, %v578
        %v587 = vpack.c.b16 %v581, %v580
        %v588 = vpack.c.b16 %v583, %v582
        %v589 = vpack.c.b16 %v585, %v584
        %vm590 = vcmask 523264
        %v592 = vsel %vm590, %v586, 0
        %v595 = vsel %vm590, %v587, 0
        %v598 = vsel %vm590, %v588, 0
        %v601 = vsel %vm590, %v589, 0
        %603 = vmatprep.subr.bf16.mxu0 %v515
        %604 = vmatpush1.bf16.msra.mxu0 %v514
        %605 = vmatprep.subr.bf16.mxu0 %v517
        %606 = vmatpush1.bf16.msra.mxu0 %v516
        %607 = vmatprep.subr.bf16.mxu0 %v519
        %608 = vmatpush1.bf16.msra.mxu0 %v518
        %609 = vmatprep.subr.bf16.mxu0 %v521
        %610 = vmatpush1.bf16.msra.mxu0 %v520
        %611 = vmatprep.subr.bf16.mxu0 0
        %612 = vmatpush1.bf16.msra.mxu0 0
        %613 = vmatprep.subr.bf16.mxu0 0
        %614 = vmatpush1.bf16.msra.mxu0 0
        %615 = vmatprep.subr.bf16.mxu0 0
        %616 = vmatpush1.bf16.msra.mxu0 0
        %617 = vmatprep.subr.bf16.mxu0 0
        %618 = vmatpush1.bf16.msra.mxu0 0
        %619 = vmatprep.subr.bf16.mxu0 0
        %620 = vmatpush1.bf16.msra.mxu0 0
        %621 = vmatprep.subr.bf16.mxu0 0
        %622 = vmatpush1.bf16.msra.mxu0 0
        %623 = vmatprep.subr.bf16.mxu0 0
        %624 = vmatpush1.bf16.msra.mxu0 0
        %625 = vmatprep.subr.bf16.mxu0 0
        %626 = vmatpush1.bf16.msra.mxu0 0
        %627 = vmatprep.subr.bf16.mxu0 0
        %628 = vmatpush1.bf16.msra.mxu0 0
        %629 = vmatprep.subr.bf16.mxu0 0
        %630 = vmatpush1.bf16.msra.mxu0 0
        %631 = vmatprep.subr.bf16.mxu0 0
        %632 = vmatpush1.bf16.msra.mxu0 0
        %633 = vmatprep.subr.bf16.mxu0 0
        %634 = vmatpush1.bf16.msra.mxu0 0
        %635 = vmatprep.mubr.bf16.mxu0 0
        %636 = vmatmul.mubr.bf16.gmra.mrb[0].mxu0 %v592
        %v637 = vpop.f32.mrb[0].mxu0
        %v638 = vadd.f32 %v533, %v637
        %v639 = vpop.f32.mrb[0].mxu0
        %v640 = vadd.f32 %v533, %v639
        %v641 = vpop.f32.mrb[0].mxu0
        %v642 = vadd.f32 %v538, %v641
        %v643 = vpop.f32.mrb[0].mxu0
        %v644 = vadd.f32 %v538, %v643
        %645 = vmatprep.mubr.bf16.mxu0 0
        %646 = vmatmul.mubr.bf16.gmra.mrb[0].mxu0 %v595
        %v647 = vpop.f32.mrb[0].mxu0
        %v648 = vadd.f32 %v543, %v647
        %v649 = vpop.f32.mrb[0].mxu0
        %v650 = vadd.f32 %v543, %v649
        %v651 = vpop.f32.mrb[0].mxu0
        %v652 = vadd.f32 %v548, %v651
        %v653 = vpop.f32.mrb[0].mxu0
        %v654 = vadd.f32 %v548, %v653
        %655 = vmatprep.mubr.bf16.mxu0 0
        %656 = vmatmul.mubr.bf16.gmra.mrb[0].mxu0 %v598
        %v657 = vpop.f32.mrb[0].mxu0
        %v658 = vadd.f32 %v553, %v657
        %v659 = vpop.f32.mrb[0].mxu0
        %v660 = vadd.f32 %v553, %v659
        %v661 = vpop.f32.mrb[0].mxu0
        %v662 = vadd.f32 %v558, %v661
        %v663 = vpop.f32.mrb[0].mxu0
        %v664 = vadd.f32 %v558, %v663
        %665 = vmatprep.mubr.bf16.mxu0 0
        %666 = vmatmul.mubr.bf16.gmra.mrb[0].mxu0 %v601
        %v667 = vpop.f32.mrb[0].mxu0
        %v668 = vadd.f32 %v563, %v667
        %v669 = vpop.f32.mrb[0].mxu0
        %v670 = vadd.f32 %v563, %v669
        %v671 = vpop.f32.mrb[0].mxu0
        %v672 = vadd.f32 %v568, %v671
        %v673 = vpop.f32.mrb[0].mxu0
        %v674 = vadd.f32 %v568, %v673
        %675 = vdwg.mxu0
        %v676 = vmax.f32 %v638, 0.0
        %v677 = vmax.f32 %v640, 0.0
        %v678 = vmax.f32 %v642, 0.0
        %v679 = vmax.f32 %v644, 0.0
        %v680 = vmax.f32 %v648, 0.0
        %v681 = vmax.f32 %v650, 0.0
        %v682 = vmax.f32 %v652, 0.0
        %v683 = vmax.f32 %v654, 0.0
        %v684 = vmax.f32 %v658, 0.0
        %v685 = vmax.f32 %v660, 0.0
        %v686 = vmax.f32 %v662, 0.0
        %v687 = vmax.f32 %v664, 0.0
        %v688 = vmax.f32 %v668, 0.0
        %v689 = vmax.f32 %v670, 0.0
        %v690 = vmax.f32 %v672, 0.0
        %v691 = vmax.f32 %v674, 0.0
        %v692 = vld [vmem:[%s5] sm:$0xff]
        %v693 = vld [vmem:[%s5 + $0x8] sm:$0xff]
        %v694 = vld [vmem:[%s5 + $0x10] sm:$0xff]
        %v695 = vld [vmem:[%s5 + $0x18] sm:$0xff]
        %v696 = vld [vmem:[%s5 + $0x20] sm:$0xff]
        %v697 = vld [vmem:[%s5 + $0x28] sm:$0xff]
        %v698 = vld [vmem:[%s5 + $0x30] sm:$0xff]
        %v699 = vld [vmem:[%s5 + $0x38] sm:$0xff]
        %701 = vset.pattern.permute.xlu0 0
        %702 = vperm.xlu0 %701, %v692
        %v703 = vpop.permute.xlu0 %702
        %706 = vset.pattern.permute.xlu0 0
        %707 = vperm.xlu0 %706, %v693
        %v708 = vpop.permute.xlu0 %707
        %711 = vset.pattern.permute.xlu0 0
        %712 = vperm.xlu0 %711, %v694
        %v713 = vpop.permute.xlu0 %712
        %716 = vset.pattern.permute.xlu0 0
        %717 = vperm.xlu0 %716, %v695
        %v718 = vpop.permute.xlu0 %717
        %721 = vset.pattern.permute.xlu0 0
        %722 = vperm.xlu0 %721, %v696
        %v723 = vpop.permute.xlu0 %722
        %726 = vset.pattern.permute.xlu0 0
        %727 = vperm.xlu0 %726, %v697
        %v728 = vpop.permute.xlu0 %727
        %731 = vset.pattern.permute.xlu0 0
        %732 = vperm.xlu0 %731, %v698
        %v733 = vpop.permute.xlu0 %732
        %736 = vset.pattern.permute.xlu0 0
        %737 = vperm.xlu0 %736, %v699
        %v738 = vpop.permute.xlu0 %737
        %v740 = vmul.f32 %v676, %v703
        %v741 = vmul.f32 %v677, %v703
        %v742 = vmul.f32 %v678, %v708
        %v743 = vmul.f32 %v679, %v708
        %v744 = vmul.f32 %v680, %v713
        %v745 = vmul.f32 %v681, %v713
        %v746 = vmul.f32 %v682, %v718
        %v747 = vmul.f32 %v683, %v718
        %v748 = vmul.f32 %v684, %v723
        %v749 = vmul.f32 %v685, %v723
        %v750 = vmul.f32 %v686, %v728
        %v751 = vmul.f32 %v687, %v728
        %v752 = vmul.f32 %v688, %v733
        %v753 = vmul.f32 %v689, %v733
        %v754 = vmul.f32 %v690, %v738
        %v755 = vmul.f32 %v691, %v738
        %v756 = vadd.f32 %v740, %v742
        %v757 = vadd.f32 %v756, %v744
        %v758 = vadd.f32 %v757, %v746
        %v759 = vadd.f32 %v758, %v748
        %v760 = vadd.f32 %v759, %v750
        %v761 = vadd.f32 %v760, %v752
        %v762 = vadd.f32 %v761, %v754
        %v763 = vrot.slane %v762, 4
        %v764 = vadd.f32 %v762, %v763
        %v765 = vrot.slane %v764, 2
        %v766 = vadd.f32 %v764, %v765
        %v767 = vrot.slane %v766, 1
        %v768 = vadd.f32 %v766, %v767
        %v769 = vadd.f32 %v741, %v743
        %v770 = vadd.f32 %v769, %v745
        %v771 = vadd.f32 %v770, %v747
        %v772 = vadd.f32 %v771, %v749
        %v773 = vadd.f32 %v772, %v751
        %v774 = vadd.f32 %v773, %v753
        %v775 = vadd.f32 %v774, %v755
        %v776 = vrot.slane %v775, 4
        %v777 = vadd.f32 %v775, %v776
        %v778 = vrot.slane %v777, 2
        %v779 = vadd.f32 %v777, %v778
        %v780 = vrot.slane %v779, 1
        %v781 = vadd.f32 %v779, %v780
        %v782 = vld [vmem:[#allocation2] sm:$0x1]
        %784 = vset.pattern.permute.xlu0 0
        %785 = vperm.xlu0 %784, %v782
        %v786 = vpop.permute.xlu0 %785
        %v788 = vlaneseq
        %v789 = vshrl.u32 %v788, 7
        %v790 = vsub.s32 0, %v789
        %v791 = vrot.slane %v786, %v790
        %v792 = vadd.f32 %v768, %v791
        %v793 = vadd.f32 %v781, %v791
        %v796 = vcombine.low %v792, %v793
        %v798 = vunpack.c.l.s4 1966171168
        %v799 = vunpack.c.0.s8 %v798
        %v800 = vlaneseq
        %v801 = vshrl.u32 %v800, 7
        %v802 = vsub.s32 %v799, %v801
        %v803 = vrot.slane %v796, %v802
        %v805 = vunpack.c.l.s4 1966171168
        %v806 = vunpack.c.0.s8 %v805
        %v807 = vlaneseq
        %v808 = vshrl.u32 %v807, 7
        %v809 = vsub.s32 %v806, %v808
        %v810 = vrot.slane %v803, %v809
        %v812 = vlaneseq
        %vm813 = vcmp.ge.s32.totalorder %v812, 0
        %vm814 = vcmp.lt.s32.totalorder %v812, 256
        %vm815 = vmand %vm813, %vm814
        %816 = vst.msk [vmem:[%s312] sm:$0x3] %vm815, %v810
        %s817 = sand.u32 %s183, 1
        %s818 = scalar_lea.sflag [#allocation5], %s817
        %s819 = sand.u32 %s183, 1
        %s820 = smul.addr %s819, 2
        %s821 = scalar_lea.vmem [#allocation4], %s820
        // Predicated region
        $region72: #{tpu_custom_call.1} parent=66 // pred_check
          %p822 = pneg %p193
        $region73: #{tpu_custom_call.1} parent=66 // pred_check_branch
          %824 = sbr.rel (%p822) target = $region75
        $region74: #{tpu_custom_call.1} parent=66 // pred_region
          %s825 = smul.u32 2, %s23
          %s827 = ssub.s32 32, 32
          %828 = vsyncadd %s818, %s827
          %s829 = smul.addr %s825, 16
          %s830 = scalar_lea.hbm %s7, %s829
          %s832 = sshll.u32 %s821, 4
          %s833 = int_to_ptr.vmem [resolvable:$true] %s832
          %835 = dma.vmem_to_hbm [thread:$0]  %s833, 32, %s830, %s818
        $region75: #{tpu_custom_call.1} parent=66 // pred_fallthru
          _
      $region67: #{tpu_custom_call.1} parent=5 // pred_fallthru
        _
      %p836 = scmp.le.s32.totalorder 2, %s18
      // Predicated region
      $region76: #{tpu_custom_call.1} parent=5 // pred_check
        %p837 = pneg %p836
      $region77: #{tpu_custom_call.1} parent=5 // pred_check_branch
        %839 = sbr.rel (%p837) target = $region79
      $region78: #{tpu_custom_call.1} parent=5 // pred_region
        %s840 = ssub.s32 %s18, 2
        // Predicated region
        $region80: #{tpu_custom_call.1} parent=78 // pred_check
          %p841 = pneg %p199
        $region81: #{tpu_custom_call.1} parent=78 // pred_check_branch
          %843 = sbr.rel (%p841) target = $region83
        $region82: #{tpu_custom_call.1} parent=78 // pred_region
          %s844 = sand.u32 %s184, 1
          %s845 = scalar_lea.sflag [#allocation5], %s844
          %s846 = sand.u32 %s184, 1
          %s847 = smul.addr %s846, 2
          %s848 = scalar_lea.vmem [#allocation4], %s847
          %849 = dma.done %s845, 32
        $region83: #{tpu_custom_call.1} parent=78 // pred_fallthru
          _
      $region79: #{tpu_custom_call.1} parent=5 // pred_fallthru
        _
    $region6: #{tpu_custom_call.1} parent=1 // loop_footer
      %s22 = sadd.s32 1, %s18
    $region7: #{tpu_custom_call.1} parent=1 // loop_footer_branch
      %17 = sbr.rel target = $region3
    $region8: #{tpu_custom_call.1} parent=1 // loop_exit
      _
    %850 = vsyncpa [#allocation5], 1
    %s851 = scalar_lea.sflag [#allocation5], 1
    %852 = vsyncpa %s851, 1

</llo_original>
